<compile_context>
chip_gen: v7x
topology: tpu7x:2x2x1
jax: 0.10.0
libtpu: 0.0.40
codegen_flags: <defaults>
</compile_context>

<pallas_src>
import jax
import jax.numpy as jnp
from jax.experimental import pallas as pl
from jax.experimental.pallas import tpu as pltpu

LANE = 128


def _round_up(x: int, m: int) -> int:
    return (x + m - 1) // m * m


def _lstm_cell_kernel(x_ref, h_ref, c_ref, w_ref, h_out_ref, c_out_ref):
    """One batch tile of the LSTM cell.

    x_ref : (TB, Kin_p)        padded input, compute dtype (bf16-friendly)
    h_ref : (TB, Hp)           padded hidden state, compute dtype
    c_ref : (TB, Hp)           padded cell state (may stay f32)
    w_ref : (Kin_p + Hp, 4Hp)  stacked [W_ih^T ; W_hh^T], gate-aligned columns
    """
    kin_p = x_ref.shape[-1]
    hp = h_ref.shape[-1]

    # Two MXU matmuls against 128-aligned row slices of the resident weight
    # (free views); f32 accumulation on the MXU.  No wrapper-side concat.
    gates = jnp.dot(x_ref[...], w_ref[:kin_p, :],
                    preferred_element_type=jnp.float32)
    gates += jnp.dot(h_ref[...], w_ref[kin_p:, :],
                     preferred_element_type=jnp.float32)

    # Gate blocks are 128-lane aligned (hp % 128 == 0) -> free slices.
    i_g = jax.nn.sigmoid(gates[:, 0 * hp:1 * hp])
    f_g = jax.nn.sigmoid(gates[:, 1 * hp:2 * hp])
    g_g = jnp.tanh(gates[:, 2 * hp:3 * hp])
    o_g = jax.nn.sigmoid(gates[:, 3 * hp:4 * hp])

    # Elementwise recurrence kept in f32 (accuracy; v5e VPU/EUP are f32-only).
    c = c_ref[...].astype(jnp.float32)
    c_new = f_g * c + i_g * g_g
    h_new = o_g * jnp.tanh(c_new)

    h_out_ref[...] = h_new.astype(h_out_ref.dtype)
    c_out_ref[...] = c_new.astype(c_out_ref.dtype)


def prepare_mega_lstm_weights(w_ih, w_hh, dtype=None):
    """One-time weight prep (hoisted out of the per-step hot path).

    w_ih: (4H, input_size), w_hh: (4H, H)  -- PyTorch LSTMCell layout.
    Returns a (Kin_p + Hp, 4*Hp) stacked weight in `dtype` where
      * rows [0, input_size)      hold W_ih^T,
      * rows [Kin_p, Kin_p + H)   hold W_hh^T,
      * each gate occupies a 128-lane-aligned column block of width Hp,
      * all padding is zero (padded lanes/rows stay exactly zero).
    Pass dtype=jnp.bfloat16 for the HBM-bound production path.
    """
    four_h, in_size = w_ih.shape
    h = w_hh.shape[1]
    assert four_h == 4 * h and w_hh.shape[0] == 4 * h
    if dtype is None:
        dtype = w_ih.dtype

    hp = _round_up(h, LANE)
    kin_p = _round_up(in_size, LANE)

    w_ih_t = w_ih.T.astype(dtype)   # (in_size, 4H)
    w_hh_t = w_hh.T.astype(dtype)   # (H, 4H)

    w = jnp.zeros((kin_p + hp, 4 * hp), dtype)
    for g in range(4):
        w = w.at[:in_size, g * hp:g * hp + h].set(w_ih_t[:, g * h:(g + 1) * h])
        w = w.at[kin_p:kin_p + h, g * hp:g * hp + h].set(w_hh_t[:, g * h:(g + 1) * h])
    return w


def _pick_batch_tile(b: int, sub: int):
    """Pick (TB, Bp) minimizing padding waste; ties -> larger tile."""
    cands = {_round_up(min(b, 256), sub), 128, 256}
    best_tb, best_bp = None, None
    for tb in sorted(cands):
        bp = _round_up(b, tb)
        if best_bp is None or bp < best_bp or (bp == best_bp and tb > best_tb):
            best_tb, best_bp = tb, bp
    return best_tb, best_bp


def _pad2d(a, rows: int, cols: int):
    """Zero-pad to (rows, cols); no copy if already that shape."""
    if a.shape == (rows, cols):
        return a
    return jnp.zeros((rows, cols), a.dtype).at[:a.shape[0], :a.shape[1]].set(a)


@jax.jit
def mega_lstm_forward(x, h0, c0, w_stacked):
    """One LSTMCell step (bias=False): returns (h', c') of shape (B, H)."""
    b, in_size = x.shape
    h = h0.shape[-1]
    kp, four_hp = w_stacked.shape
    hp = four_hp // 4
    kin_p = kp - hp
    assert hp == _round_up(h, LANE) and kin_p == _round_up(in_size, LANE)

    sub = 8 if x.dtype == jnp.float32 else 16      # f32 sublane = 8, bf16 = 16
    tb, bp = _pick_batch_tile(b, sub)

    # Zero-padding keeps padded lanes/rows exactly inert; skipped entirely if
    # the caller already hands in aligned (Bp, *) arrays.
    x_pad = _pad2d(x, bp, kin_p)
    h_pad = _pad2d(h0, bp, hp)
    c_pad = _pad2d(c0, bp, hp)

    w_bytes = kp * four_hp * w_stacked.dtype.itemsize
    act_bytes = bp * (kin_p * x_pad.dtype.itemsize
                      + 2 * hp * h_pad.dtype.itemsize
                      + 2 * hp * c_pad.dtype.itemsize)
    cost = pl.CostEstimate(
        flops=2 * bp * kp * four_hp,
        transcendentals=5 * bp * hp,
        bytes_accessed=w_bytes + act_bytes,
    )

    # Resident weight block (constant index map -> DMA'd once).  Once it is
    # large enough that double-buffering threatens v7x's 64 MiB VMEM, request
    # a single buffer -- the block never changes across the batch grid.
    if w_bytes >= (8 << 20):
        w_spec = pl.BlockSpec((kp, four_hp), lambda i: (0, 0),
                              pipeline_mode=pl.Buffered(1))
        w_resident_bytes = w_bytes
    else:
        w_spec = pl.BlockSpec((kp, four_hp), lambda i: (0, 0))
        w_resident_bytes = 2 * w_bytes

    # Scoped-VMEM budget: resident weights + double-buffered activation tiles
    # + f32 gate intermediates, with headroom.  The 16/32 MiB defaults are too
    # small for realistic H.
    tile_bytes = 2 * tb * (kin_p * x_pad.dtype.itemsize
                           + 2 * hp * h_pad.dtype.itemsize
                           + 2 * hp * c_pad.dtype.itemsize) + 4 * tb * four_hp
    vmem_limit = min(100 << 20,
                     max(32 << 20, int(1.5 * (w_resident_bytes + tile_bytes))))

    h_out, c_out = pl.pallas_call(
        _lstm_cell_kernel,
        out_shape=(
            jax.ShapeDtypeStruct((bp, hp), h_pad.dtype),
            jax.ShapeDtypeStruct((bp, hp), c_pad.dtype),
        ),
        grid_spec=pltpu.PrefetchScalarGridSpec(
            num_scalar_prefetch=0,
            grid=(bp // tb,),
            in_specs=[
                pl.BlockSpec((tb, kin_p), lambda i: (i, 0)),   # x tile
                pl.BlockSpec((tb, hp), lambda i: (i, 0)),      # h tile
                pl.BlockSpec((tb, hp), lambda i: (i, 0)),      # c tile
                w_spec,                                        # resident weights
            ],
            out_specs=[
                pl.BlockSpec((tb, hp), lambda i: (i, 0)),      # h'
                pl.BlockSpec((tb, hp), lambda i: (i, 0)),      # c'
            ],
        ),
        compiler_params=pltpu.CompilerParams(
            dimension_semantics=("parallel",),
            vmem_limit_bytes=vmem_limit,
        ),
        input_output_aliases={1: 0, 2: 1},                     # h->h', c->c'
        cost_estimate=cost,
    )(x_pad, h_pad, c_pad, w_stacked)

    if (b, h) == (bp, hp):
        return h_out, c_out
    return h_out[:b, :h], c_out[:b, :h]


def _reference_lstm(x, h0, c0, w_ih, w_hh):
    h = h0.shape[-1]
    gates = x @ w_ih.T + h0 @ w_hh.T
    i_g = jax.nn.sigmoid(gates[:, 0 * h:1 * h])
    f_g = jax.nn.sigmoid(gates[:, 1 * h:2 * h])
    g_g = jnp.tanh(gates[:, 2 * h:3 * h])
    o_g = jax.nn.sigmoid(gates[:, 3 * h:4 * h])
    c_new = f_g * c0 + i_g * g_g
    h_new = o_g * jnp.tanh(c_new)
    return h_new, c_new


if __name__ == "__main__":
    B = 2
    INPUT_SIZE = 16
    HIDDEN = 32

    key = jax.random.PRNGKey(0)
    kx, kwih, kwhh = jax.random.split(key, 3)

    # PyTorch LSTMCell init scale: U(-1/sqrt(H), 1/sqrt(H)).
    bound = 1.0 / (HIDDEN ** 0.5)
    w_ih = jax.random.uniform(kwih, (4 * HIDDEN, INPUT_SIZE), jnp.float32, -bound, bound)
    w_hh = jax.random.uniform(kwhh, (4 * HIDDEN, HIDDEN), jnp.float32, -bound, bound)

    x = jax.random.normal(kx, (B, INPUT_SIZE), jnp.float32)
    # hidden=None in the PyTorch forward -> zero-initialized (h, c).
    h0 = jnp.zeros((B, HIDDEN), jnp.float32)
    c0 = jnp.zeros((B, HIDDEN), jnp.float32)

    h_ref, c_ref = _reference_lstm(x, h0, c0, w_ih, w_hh)

    # --- f32 path (strict numerics check) ------------------------------------
    w_f32 = prepare_mega_lstm_weights(w_ih, w_hh)
    h_new, c_new = mega_lstm_forward(x, h0, c0, w_f32)
    jax.block_until_ready((h_new, c_new))
    assert h_new.shape == (B, HIDDEN) and c_new.shape == (B, HIDDEN)
    assert jnp.allclose(h_new, h_ref, atol=1e-5, rtol=1e-5), "h mismatch (f32)"
    assert jnp.allclose(c_new, c_ref, atol=1e-5, rtol=1e-5), "c mismatch (f32)"

    # --- bf16 weights/activations (production path: halves the HBM weight
    #     stream; cell state c stays f32 so the recurrence does not drift) ----
    w_bf16 = prepare_mega_lstm_weights(w_ih, w_hh, dtype=jnp.bfloat16)
    h_bf, c_bf = mega_lstm_forward(
        x.astype(jnp.bfloat16), h0.astype(jnp.bfloat16), c0, w_bf16)
    jax.block_until_ready((h_bf, c_bf))
    assert jnp.allclose(h_bf.astype(jnp.float32), h_ref, atol=3e-2), "h mismatch (bf16)"
    assert jnp.allclose(c_bf.astype(jnp.float32), c_ref, atol=3e-2), "c mismatch (bf16)"

    print("KERNEL_OK")
</pallas_src>

<mosaic_0001>
module attributes {stable_mosaic.version = 11 : i64} {
  func.func @_lstm_cell_kernel(%arg0: i32, %arg1: memref<8x128xf32, #tpu.memory_space<vmem>>, %arg2: memref<8x128xf32, #tpu.memory_space<vmem>>, %arg3: memref<8x128xf32, #tpu.memory_space<vmem>>, %arg4: memref<256x512xf32, #tpu.memory_space<vmem>>, %arg5: memref<8x128xf32, #tpu.memory_space<vmem>>, %arg6: memref<8x128xf32, #tpu.memory_space<vmem>>) attributes {dimension_semantics = [#tpu.dimension_semantics<parallel>], iteration_bounds = array<i64: 1>, scalar_prefetch = 0 : i64, scratch_operands = 0 : i64, tpu.core_type = #tpu.core_type<tc>, window_params = [{transform_indices = @transform_0, window_bounds = array<i64: 8, 128>}, {transform_indices = @transform_1, window_bounds = array<i64: 8, 128>}, {transform_indices = @transform_2, window_bounds = array<i64: 8, 128>}, {pipeline_mode = #tpu.pipeline_mode<synchronous>, transform_indices = @transform_3, window_bounds = array<i64: 256, 512>}, {transform_indices = @transform_4, window_bounds = array<i64: 8, 128>}, {transform_indices = @transform_5, window_bounds = array<i64: 8, 128>}]} {
    %c0 = arith.constant 0 : index
    %c0_0 = arith.constant 0 : index
    %0 = vector.load %arg1[%c0, %c0_0] : memref<8x128xf32, #tpu.memory_space<vmem>>, vector<8x128xf32>
    %c0_1 = arith.constant 0 : index
    %c0_2 = arith.constant 0 : index
    %1 = vector.load %arg4[%c0_1, %c0_2] : memref<256x512xf32, #tpu.memory_space<vmem>>, vector<128x512xf32>
    %cst = arith.constant dense<0.000000e+00> : vector<8x512xf32>
    %2 = tpu.matmul %0, %1, %cst {dimension_numbers = #tpu.dot_dimension_numbers<[1], [0], [0], [1], [0, 0, 1, 1], [], []>} : vector<8x128xf32>, vector<128x512xf32>, vector<8x512xf32> -> vector<8x512xf32>
    %c0_3 = arith.constant 0 : index
    %c0_4 = arith.constant 0 : index
    %3 = vector.load %arg2[%c0_3, %c0_4] : memref<8x128xf32, #tpu.memory_space<vmem>>, vector<8x128xf32>
    %c128 = arith.constant 128 : index
    %c0_5 = arith.constant 0 : index
    %4 = vector.load %arg4[%c128, %c0_5] : memref<256x512xf32, #tpu.memory_space<vmem>>, vector<128x512xf32>
    %cst_6 = arith.constant dense<0.000000e+00> : vector<8x512xf32>
    %5 = tpu.matmul %3, %4, %cst_6 {dimension_numbers = #tpu.dot_dimension_numbers<[1], [0], [0], [1], [0, 0, 1, 1], [], []>} : vector<8x128xf32>, vector<128x512xf32>, vector<8x512xf32> -> vector<8x512xf32>
    %6 = arith.addf %2, %5 : vector<8x512xf32>
    %7 = vector.extract_strided_slice %6 {offsets = [0, 0], sizes = [8, 128], strides = [1, 1]} : vector<8x512xf32> to vector<8x128xf32>
    %8 = arith.negf %7 : vector<8x128xf32>
    %9 = math.exp %8 : vector<8x128xf32>
    %cst_7 = arith.constant 1.000000e+00 : f32
    %10 = vector.broadcast %cst_7 : f32 to vector<8x128xf32>
    %11 = arith.addf %10, %9 : vector<8x128xf32>
    %12 = arith.divf %10, %11 : vector<8x128xf32>
    %13 = vector.extract_strided_slice %6 {offsets = [0, 128], sizes = [8, 128], strides = [1, 1]} : vector<8x512xf32> to vector<8x128xf32>
    %14 = arith.negf %13 : vector<8x128xf32>
    %15 = math.exp %14 : vector<8x128xf32>
    %cst_8 = arith.constant 1.000000e+00 : f32
    %16 = vector.broadcast %cst_8 : f32 to vector<8x128xf32>
    %17 = arith.addf %16, %15 : vector<8x128xf32>
    %18 = arith.divf %16, %17 : vector<8x128xf32>
    %19 = vector.extract_strided_slice %6 {offsets = [0, 256], sizes = [8, 128], strides = [1, 1]} : vector<8x512xf32> to vector<8x128xf32>
    %20 = math.tanh %19 : vector<8x128xf32>
    %21 = vector.extract_strided_slice %6 {offsets = [0, 384], sizes = [8, 128], strides = [1, 1]} : vector<8x512xf32> to vector<8x128xf32>
    %22 = arith.negf %21 : vector<8x128xf32>
    %23 = math.exp %22 : vector<8x128xf32>
    %cst_9 = arith.constant 1.000000e+00 : f32
    %24 = vector.broadcast %cst_9 : f32 to vector<8x128xf32>
    %25 = arith.addf %24, %23 : vector<8x128xf32>
    %26 = arith.divf %24, %25 : vector<8x128xf32>
    %c0_10 = arith.constant 0 : index
    %c0_11 = arith.constant 0 : index
    %27 = vector.load %arg3[%c0_10, %c0_11] : memref<8x128xf32, #tpu.memory_space<vmem>>, vector<8x128xf32>
    %28 = arith.mulf %18, %27 : vector<8x128xf32>
    %29 = arith.mulf %12, %20 : vector<8x128xf32>
    %30 = arith.addf %28, %29 : vector<8x128xf32>
    %31 = math.tanh %30 : vector<8x128xf32>
    %32 = arith.mulf %26, %31 : vector<8x128xf32>
    %c0_12 = arith.constant 0 : index
    %c0_13 = arith.constant 0 : index
    %33 = vector.load %arg5[%c0_12, %c0_13] : memref<8x128xf32, #tpu.memory_space<vmem>>, vector<8x128xf32>
    tpu.vector_store %arg5[%c0_12, %c0_13], %32 {strides = array<i32>} : memref<8x128xf32, #tpu.memory_space<vmem>>, vector<8x128xf32>,
    %c0_14 = arith.constant 0 : index
    %c0_15 = arith.constant 0 : index
    %34 = vector.load %arg6[%c0_14, %c0_15] : memref<8x128xf32, #tpu.memory_space<vmem>>, vector<8x128xf32>
    tpu.vector_store %arg6[%c0_14, %c0_15], %30 {strides = array<i32>} : memref<8x128xf32, #tpu.memory_space<vmem>>, vector<8x128xf32>,
    return
  }
  func.func @transform_0(%arg0: i32) -> (i32, i32) {
    %c0_i32 = arith.constant 0 : i32
    %c0_i32_0 = arith.constant 0 : i32
    return %arg0, %c0_i32 : i32, i32
  }
  func.func @transform_1(%arg0: i32) -> (i32, i32) {
    %c0_i32 = arith.constant 0 : i32
    %c0_i32_0 = arith.constant 0 : i32
    return %arg0, %c0_i32 : i32, i32
  }
  func.func @transform_2(%arg0: i32) -> (i32, i32) {
    %c0_i32 = arith.constant 0 : i32
    %c0_i32_0 = arith.constant 0 : i32
    return %arg0, %c0_i32 : i32, i32
  }
  func.func @transform_3(%arg0: i32) -> (i32, i32) {
    %c0_i32 = arith.constant 0 : i32
    %c0_i32_0 = arith.constant 0 : i32
    %c0_i32_1 = arith.constant 0 : i32
    return %c0_i32, %c0_i32_0 : i32, i32
  }
  func.func @transform_4(%arg0: i32) -> (i32, i32) {
    %c0_i32 = arith.constant 0 : i32
    %c0_i32_0 = arith.constant 0 : i32
    return %arg0, %c0_i32 : i32, i32
  }
  func.func @transform_5(%arg0: i32) -> (i32, i32) {
    %c0_i32 = arith.constant 0 : i32
    %c0_i32_0 = arith.constant 0 : i32
    return %arg0, %c0_i32 : i32, i32
  }
}

</mosaic_0001>

<llo_original>
// kernel: mega_lstm_forward.1
$region0: #{mega_lstm_forward.1}
  #allocation0 [shape = 'u32[]', space=smem, size = 0x4, offset = 0x4, fixed_abs, tag = 'smem constant byte address 0x4 - core index']
  #allocation1 [shape = 'u32[144,128]{1,0:T(1,128)}', space=vmem, size = 0x12000, scoped, tag = 'internal scratch']
  %s0 = inlined_call_operand.vmem [shape: f32[8,128], index: 0, kind: input, shape index: {}]
  %s1 = inlined_call_operand.vmem [shape: f32[8,128], index: 1, kind: input, shape index: {}, may-alias: {1,4}]
  %s2 = inlined_call_operand.vmem [shape: f32[8,128], index: 2, kind: input, shape index: {}, may-alias: {2,5}]
  %s3 = inlined_call_operand.hbm [shape: f32[256,512], index: 3, kind: input, shape index: {}]
  %s4 = inlined_call_operand.vmem [shape: f32[8,128], index: 4, kind: output, shape index: {0}, may-alias: {1,4}]
  %s5 = inlined_call_operand.vmem [shape: f32[8,128], index: 5, kind: output, shape index: {1}, may-alias: {2,5}]
  %6 = xla_tuple %s4, %s5
  %s7 = sld [smem:[#allocation0]]
  $region38: #{mega_lstm_forward.1} parent=0
    _
  %s9 = ssub.s32 1, %s7
  %s10 = scalar_select 0, %s9, %s7
  $region1: #{mega_lstm_forward.1} parent=0
    #allocation2 [shape = 'u8[524288]{0}', space=vmem, size = 0x80000, scoped, tag = 'input window, operand 3, single buffered']
    #allocation3 [shape = 's32[1]{0}', space=sflag, size = 0x4, scoped, tag = 'scoped memory for mega_lstm_forward.1']
    %11 = vsyncpa [#allocation3], 0
    // Predicated region
    $region2: #{mega_lstm_forward.1} parent=1 // pred_check
      _
    $region3: #{mega_lstm_forward.1} parent=1 // pred_check_branch
      %13 = sbr.rel (0) target = $region5
    $region4: #{mega_lstm_forward.1} parent=1 // pred_region
      _
    $region5: #{mega_lstm_forward.1} parent=1 // pred_fallthru
      _
    // Predicated region
    $region6: #{mega_lstm_forward.1} parent=1 // pred_check
      _
    $region7: #{mega_lstm_forward.1} parent=1 // pred_check_branch
      %15 = sbr.rel (0) target = $region9
    $region8: #{mega_lstm_forward.1} parent=1 // pred_region
      _
    $region9: #{mega_lstm_forward.1} parent=1 // pred_fallthru
      _
    // Predicated region
    $region10: #{mega_lstm_forward.1} parent=1 // pred_check
      _
    $region11: #{mega_lstm_forward.1} parent=1 // pred_check_branch
      %17 = sbr.rel (0) target = $region13
    $region12: #{mega_lstm_forward.1} parent=1 // pred_region
      _
    $region13: #{mega_lstm_forward.1} parent=1 // pred_fallthru
      _
    // Predicated region
    $region14: #{mega_lstm_forward.1} parent=1 // pred_check
      _
    $region15: #{mega_lstm_forward.1} parent=1 // pred_check_branch
      %19 = sbr.rel (0) target = $region17
    $region16: #{mega_lstm_forward.1} parent=1 // pred_region
      %s21 = ssub.s32 16384, 16384
      %22 = vsyncadd [#allocation3], %s21
      %s23 = sshll.u32 [#allocation2], 4
      %s24 = int_to_ptr.vmem [resolvable:$true] %s23
      %29 = dma.hbm_to_vmem [thread:$0]  %s3, 16384, %s24, [#allocation3], 512, 512, 32
    $region17: #{mega_lstm_forward.1} parent=1 // pred_fallthru
      _
    // Predicated region
    $region18: #{mega_lstm_forward.1} parent=1 // pred_check
      _
    $region19: #{mega_lstm_forward.1} parent=1 // pred_check_branch
      %31 = sbr.rel (0) target = $region21
    $region20: #{mega_lstm_forward.1} parent=1 // pred_region
      %32 = dma.done [#allocation3], 16384
    $region21: #{mega_lstm_forward.1} parent=1 // pred_fallthru
      _
    %v33 = vld [vmem:[%s0] sm:$0xff]
    %v34 = vld [vmem:[#allocation2] sm:$0xff]
    %v35 = vld [vmem:[#allocation2 + $0x8] sm:$0xff]
    %v36 = vld [vmem:[#allocation2 + $0x10] sm:$0xff]
    %v37 = vld [vmem:[#allocation2 + $0x18] sm:$0xff]
    %v38 = vld [vmem:[#allocation2 + $0x20] sm:$0xff]
    %v39 = vld [vmem:[#allocation2 + $0x28] sm:$0xff]
    %v40 = vld [vmem:[#allocation2 + $0x30] sm:$0xff]
    %v41 = vld [vmem:[#allocation2 + $0x38] sm:$0xff]
    %v42 = vld [vmem:[#allocation2 + $0x40] sm:$0xff]
    %v43 = vld [vmem:[#allocation2 + $0x48] sm:$0xff]
    %v44 = vld [vmem:[#allocation2 + $0x50] sm:$0xff]
    %v45 = vld [vmem:[#allocation2 + $0x58] sm:$0xff]
    %v46 = vld [vmem:[#allocation2 + $0x60] sm:$0xff]
    %v47 = vld [vmem:[#allocation2 + $0x68] sm:$0xff]
    %v48 = vld [vmem:[#allocation2 + $0x70] sm:$0xff]
    %v49 = vld [vmem:[#allocation2 + $0x78] sm:$0xff]
    %v50 = vld [vmem:[#allocation2 + $0x80] sm:$0xff]
    %v51 = vld [vmem:[#allocation2 + $0x88] sm:$0xff]
    %v52 = vld [vmem:[#allocation2 + $0x90] sm:$0xff]
    %v53 = vld [vmem:[#allocation2 + $0x98] sm:$0xff]
    %v54 = vld [vmem:[#allocation2 + $0xa0] sm:$0xff]
    %v55 = vld [vmem:[#allocation2 + $0xa8] sm:$0xff]
    %v56 = vld [vmem:[#allocation2 + $0xb0] sm:$0xff]
    %v57 = vld [vmem:[#allocation2 + $0xb8] sm:$0xff]
    %v58 = vld [vmem:[#allocation2 + $0xc0] sm:$0xff]
    %v59 = vld [vmem:[#allocation2 + $0xc8] sm:$0xff]
    %v60 = vld [vmem:[#allocation2 + $0xd0] sm:$0xff]
    %v61 = vld [vmem:[#allocation2 + $0xd8] sm:$0xff]
    %v62 = vld [vmem:[#allocation2 + $0xe0] sm:$0xff]
    %v63 = vld [vmem:[#allocation2 + $0xe8] sm:$0xff]
    %v64 = vld [vmem:[#allocation2 + $0xf0] sm:$0xff]
    %v65 = vld [vmem:[#allocation2 + $0xf8] sm:$0xff]
    %v66 = vld [vmem:[#allocation2 + $0x100] sm:$0xff]
    %v67 = vld [vmem:[#allocation2 + $0x108] sm:$0xff]
    %v68 = vld [vmem:[#allocation2 + $0x110] sm:$0xff]
    %v69 = vld [vmem:[#allocation2 + $0x118] sm:$0xff]
    %v70 = vld [vmem:[#allocation2 + $0x120] sm:$0xff]
    %v71 = vld [vmem:[#allocation2 + $0x128] sm:$0xff]
    %v72 = vld [vmem:[#allocation2 + $0x130] sm:$0xff]
    %v73 = vld [vmem:[#allocation2 + $0x138] sm:$0xff]
    %v74 = vld [vmem:[#allocation2 + $0x140] sm:$0xff]
    %v75 = vld [vmem:[#allocation2 + $0x148] sm:$0xff]
    %v76 = vld [vmem:[#allocation2 + $0x150] sm:$0xff]
    %v77 = vld [vmem:[#allocation2 + $0x158] sm:$0xff]
    %v78 = vld [vmem:[#allocation2 + $0x160] sm:$0xff]
    %v79 = vld [vmem:[#allocation2 + $0x168] sm:$0xff]
    %v80 = vld [vmem:[#allocation2 + $0x170] sm:$0xff]
    %v81 = vld [vmem:[#allocation2 + $0x178] sm:$0xff]
    %v82 = vld [vmem:[#allocation2 + $0x180] sm:$0xff]
    %v83 = vld [vmem:[#allocation2 + $0x188] sm:$0xff]
    %v84 = vld [vmem:[#allocation2 + $0x190] sm:$0xff]
    %v85 = vld [vmem:[#allocation2 + $0x198] sm:$0xff]
    %v86 = vld [vmem:[#allocation2 + $0x1a0] sm:$0xff]
    %v87 = vld [vmem:[#allocation2 + $0x1a8] sm:$0xff]
    %v88 = vld [vmem:[#allocation2 + $0x1b0] sm:$0xff]
    %v89 = vld [vmem:[#allocation2 + $0x1b8] sm:$0xff]
    %v90 = vld [vmem:[#allocation2 + $0x1c0] sm:$0xff]
    %v91 = vld [vmem:[#allocation2 + $0x1c8] sm:$0xff]
    %v92 = vld [vmem:[#allocation2 + $0x1d0] sm:$0xff]
    %v93 = vld [vmem:[#allocation2 + $0x1d8] sm:$0xff]
    %v94 = vld [vmem:[#allocation2 + $0x1e0] sm:$0xff]
    %v95 = vld [vmem:[#allocation2 + $0x1e8] sm:$0xff]
    %v96 = vld [vmem:[#allocation2 + $0x1f0] sm:$0xff]
    %v97 = vld [vmem:[#allocation2 + $0x1f8] sm:$0xff]
    %v98 = vld [vmem:[%s1] sm:$0xff]
    %v99 = vld [vmem:[#allocation2 + $0x200] sm:$0xff]
    %v100 = vld [vmem:[#allocation2 + $0x208] sm:$0xff]
    %v101 = vld [vmem:[#allocation2 + $0x210] sm:$0xff]
    %v102 = vld [vmem:[#allocation2 + $0x218] sm:$0xff]
    %v103 = vld [vmem:[#allocation2 + $0x220] sm:$0xff]
    %v104 = vld [vmem:[#allocation2 + $0x228] sm:$0xff]
    %v105 = vld [vmem:[#allocation2 + $0x230] sm:$0xff]
    %v106 = vld [vmem:[#allocation2 + $0x238] sm:$0xff]
    %v107 = vld [vmem:[#allocation2 + $0x240] sm:$0xff]
    %v108 = vld [vmem:[#allocation2 + $0x248] sm:$0xff]
    %v109 = vld [vmem:[#allocation2 + $0x250] sm:$0xff]
    %v110 = vld [vmem:[#allocation2 + $0x258] sm:$0xff]
    %v111 = vld [vmem:[#allocation2 + $0x260] sm:$0xff]
    %v112 = vld [vmem:[#allocation2 + $0x268] sm:$0xff]
    %v113 = vld [vmem:[#allocation2 + $0x270] sm:$0xff]
    %v114 = vld [vmem:[#allocation2 + $0x278] sm:$0xff]
    %v115 = vld [vmem:[#allocation2 + $0x280] sm:$0xff]
    %v116 = vld [vmem:[#allocation2 + $0x288] sm:$0xff]
    %v117 = vld [vmem:[#allocation2 + $0x290] sm:$0xff]
    %v118 = vld [vmem:[#allocation2 + $0x298] sm:$0xff]
    %v119 = vld [vmem:[#allocation2 + $0x2a0] sm:$0xff]
    %v120 = vld [vmem:[#allocation2 + $0x2a8] sm:$0xff]
    %v121 = vld [vmem:[#allocation2 + $0x2b0] sm:$0xff]
    %v122 = vld [vmem:[#allocation2 + $0x2b8] sm:$0xff]
    %v123 = vld [vmem:[#allocation2 + $0x2c0] sm:$0xff]
    %v124 = vld [vmem:[#allocation2 + $0x2c8] sm:$0xff]
    %v125 = vld [vmem:[#allocation2 + $0x2d0] sm:$0xff]
    %v126 = vld [vmem:[#allocation2 + $0x2d8] sm:$0xff]
    %v127 = vld [vmem:[#allocation2 + $0x2e0] sm:$0xff]
    %v128 = vld [vmem:[#allocation2 + $0x2e8] sm:$0xff]
    %v129 = vld [vmem:[#allocation2 + $0x2f0] sm:$0xff]
    %v130 = vld [vmem:[#allocation2 + $0x2f8] sm:$0xff]
    %v131 = vld [vmem:[#allocation2 + $0x300] sm:$0xff]
    %v132 = vld [vmem:[#allocation2 + $0x308] sm:$0xff]
    %v133 = vld [vmem:[#allocation2 + $0x310] sm:$0xff]
    %v134 = vld [vmem:[#allocation2 + $0x318] sm:$0xff]
    %v135 = vld [vmem:[#allocation2 + $0x320] sm:$0xff]
    %v136 = vld [vmem:[#allocation2 + $0x328] sm:$0xff]
    %v137 = vld [vmem:[#allocation2 + $0x330] sm:$0xff]
    %v138 = vld [vmem:[#allocation2 + $0x338] sm:$0xff]
    %v139 = vld [vmem:[#allocation2 + $0x340] sm:$0xff]
    %v140 = vld [vmem:[#allocation2 + $0x348] sm:$0xff]
    %v141 = vld [vmem:[#allocation2 + $0x350] sm:$0xff]
    %v142 = vld [vmem:[#allocation2 + $0x358] sm:$0xff]
    %v143 = vld [vmem:[#allocation2 + $0x360] sm:$0xff]
    %v144 = vld [vmem:[#allocation2 + $0x368] sm:$0xff]
    %v145 = vld [vmem:[#allocation2 + $0x370] sm:$0xff]
    %v146 = vld [vmem:[#allocation2 + $0x378] sm:$0xff]
    %v147 = vld [vmem:[#allocation2 + $0x380] sm:$0xff]
    %v148 = vld [vmem:[#allocation2 + $0x388] sm:$0xff]
    %v149 = vld [vmem:[#allocation2 + $0x390] sm:$0xff]
    %v150 = vld [vmem:[#allocation2 + $0x398] sm:$0xff]
    %v151 = vld [vmem:[#allocation2 + $0x3a0] sm:$0xff]
    %v152 = vld [vmem:[#allocation2 + $0x3a8] sm:$0xff]
    %v153 = vld [vmem:[#allocation2 + $0x3b0] sm:$0xff]
    %v154 = vld [vmem:[#allocation2 + $0x3b8] sm:$0xff]
    %v155 = vld [vmem:[#allocation2 + $0x3c0] sm:$0xff]
    %v156 = vld [vmem:[#allocation2 + $0x3c8] sm:$0xff]
    %v157 = vld [vmem:[#allocation2 + $0x3d0] sm:$0xff]
    %v158 = vld [vmem:[#allocation2 + $0x3d8] sm:$0xff]
    %v159 = vld [vmem:[#allocation2 + $0x3e0] sm:$0xff]
    %v160 = vld [vmem:[#allocation2 + $0x3e8] sm:$0xff]
    %v161 = vld [vmem:[#allocation2 + $0x3f0] sm:$0xff]
    %v162 = vld [vmem:[#allocation2 + $0x3f8] sm:$0xff]
    %163 = vmatprep.subr.mxu0 %v100
    %164 = vmatpush1.msra.mxu0 %v99
    %165 = vmatprep.subr.mxu0 %v104
    %166 = vmatpush1.msra.mxu0 %v103
    %167 = vmatprep.subr.mxu0 %v108
    %168 = vmatpush1.msra.mxu0 %v107
    %169 = vmatprep.subr.mxu0 %v112
    %170 = vmatpush1.msra.mxu0 %v111
    %171 = vmatprep.subr.mxu0 %v116
    %172 = vmatpush1.msra.mxu0 %v115
    %173 = vmatprep.subr.mxu0 %v120
    %174 = vmatpush1.msra.mxu0 %v119
    %175 = vmatprep.subr.mxu0 %v124
    %176 = vmatpush1.msra.mxu0 %v123
    %177 = vmatprep.subr.mxu0 %v128
    %178 = vmatpush1.msra.mxu0 %v127
    %179 = vmatprep.subr.mxu0 %v132
    %180 = vmatpush1.msra.mxu0 %v131
    %181 = vmatprep.subr.mxu0 %v136
    %182 = vmatpush1.msra.mxu0 %v135
    %183 = vmatprep.subr.mxu0 %v140
    %184 = vmatpush1.msra.mxu0 %v139
    %185 = vmatprep.subr.mxu0 %v144
    %186 = vmatpush1.msra.mxu0 %v143
    %187 = vmatprep.subr.mxu0 %v148
    %188 = vmatpush1.msra.mxu0 %v147
    %189 = vmatprep.subr.mxu0 %v152
    %190 = vmatpush1.msra.mxu0 %v151
    %191 = vmatprep.subr.mxu0 %v156
    %192 = vmatpush1.msra.mxu0 %v155
    %193 = vmatprep.subr.mxu0 %v160
    %194 = vmatpush1.msra.mxu0 %v159
    %195 = vmatprep.subr.mxu0 0.0
    %196 = vmatpush1.msra.mxu0 0.0
    %197 = vmatprep.subr.mxu0 0.0
    %198 = vmatpush1.msra.mxu0 0.0
    %199 = vmatprep.subr.mxu0 0.0
    %200 = vmatpush1.msra.mxu0 0.0
    %201 = vmatprep.subr.mxu0 0.0
    %202 = vmatpush1.msra.mxu0 0.0
    %203 = vmatprep.subr.mxu0 0.0
    %204 = vmatpush1.msra.mxu0 0.0
    %205 = vmatprep.subr.mxu0 0.0
    %206 = vmatpush1.msra.mxu0 0.0
    %207 = vmatprep.subr.mxu0 0.0
    %208 = vmatpush1.msra.mxu0 0.0
    %209 = vmatprep.subr.mxu0 0.0
    %210 = vmatpush1.msra.mxu0 0.0
    %211 = vmatprep.subr.mxu0 0.0
    %212 = vmatpush1.msra.mxu0 0.0
    %213 = vmatprep.subr.mxu0 0.0
    %214 = vmatpush1.msra.mxu0 0.0
    %215 = vmatprep.subr.mxu0 0.0
    %216 = vmatpush1.msra.mxu0 0.0
    %217 = vmatprep.subr.mxu0 0.0
    %218 = vmatpush1.msra.mxu0 0.0
    %219 = vmatprep.subr.mxu0 0.0
    %220 = vmatpush1.msra.mxu0 0.0
    %221 = vmatprep.subr.mxu0 0.0
    %222 = vmatpush1.msra.mxu0 0.0
    %223 = vmatprep.subr.mxu0 0.0
    %224 = vmatpush1.msra.mxu0 0.0
    %225 = vmatprep.subr.mxu0 0.0
    %226 = vmatpush1.msra.mxu0 0.0
    %227 = vmatprep.mubr.f32.mxu0 0.0
    %228 = vmatmul.mubr.f32.gmra.mrb[0].mxu0 %v98
    %v229 = vpop.f32.mrb[0].mxu0
    %v230 = vadd.f32 0.0, %v229
    %v231 = vpop.f32.mrb[0].mxu0
    %v232 = vadd.f32 0.0, %v231
    %233 = vdwg.mxu0
    %234 = vmatprep.subr.mxu0 %v102
    %235 = vmatpush1.msra.mxu0 %v101
    %236 = vmatprep.subr.mxu0 %v106
    %237 = vmatpush1.msra.mxu0 %v105
    %238 = vmatprep.subr.mxu0 %v110
    %239 = vmatpush1.msra.mxu0 %v109
    %240 = vmatprep.subr.mxu0 %v114
    %241 = vmatpush1.msra.mxu0 %v113
    %242 = vmatprep.subr.mxu0 %v118
    %243 = vmatpush1.msra.mxu0 %v117
    %244 = vmatprep.subr.mxu0 %v122
    %245 = vmatpush1.msra.mxu0 %v121
    %246 = vmatprep.subr.mxu0 %v126
    %247 = vmatpush1.msra.mxu0 %v125
    %248 = vmatprep.subr.mxu0 %v130
    %249 = vmatpush1.msra.mxu0 %v129
    %250 = vmatprep.subr.mxu0 %v134
    %251 = vmatpush1.msra.mxu0 %v133
    %252 = vmatprep.subr.mxu0 %v138
    %253 = vmatpush1.msra.mxu0 %v137
    %254 = vmatprep.subr.mxu0 %v142
    %255 = vmatpush1.msra.mxu0 %v141
    %256 = vmatprep.subr.mxu0 %v146
    %257 = vmatpush1.msra.mxu0 %v145
    %258 = vmatprep.subr.mxu0 %v150
    %259 = vmatpush1.msra.mxu0 %v149
    %260 = vmatprep.subr.mxu0 %v154
    %261 = vmatpush1.msra.mxu0 %v153
    %262 = vmatprep.subr.mxu0 %v158
    %263 = vmatpush1.msra.mxu0 %v157
    %264 = vmatprep.subr.mxu0 %v162
    %265 = vmatpush1.msra.mxu0 %v161
    %266 = vmatprep.subr.mxu0 0.0
    %267 = vmatpush1.msra.mxu0 0.0
    %268 = vmatprep.subr.mxu0 0.0
    %269 = vmatpush1.msra.mxu0 0.0
    %270 = vmatprep.subr.mxu0 0.0
    %271 = vmatpush1.msra.mxu0 0.0
    %272 = vmatprep.subr.mxu0 0.0
    %273 = vmatpush1.msra.mxu0 0.0
    %274 = vmatprep.subr.mxu0 0.0
    %275 = vmatpush1.msra.mxu0 0.0
    %276 = vmatprep.subr.mxu0 0.0
    %277 = vmatpush1.msra.mxu0 0.0
    %278 = vmatprep.subr.mxu0 0.0
    %279 = vmatpush1.msra.mxu0 0.0
    %280 = vmatprep.subr.mxu0 0.0
    %281 = vmatpush1.msra.mxu0 0.0
    %282 = vmatprep.subr.mxu0 0.0
    %283 = vmatpush1.msra.mxu0 0.0
    %284 = vmatprep.subr.mxu0 0.0
    %285 = vmatpush1.msra.mxu0 0.0
    %286 = vmatprep.subr.mxu0 0.0
    %287 = vmatpush1.msra.mxu0 0.0
    %288 = vmatprep.subr.mxu0 0.0
    %289 = vmatpush1.msra.mxu0 0.0
    %290 = vmatprep.subr.mxu0 0.0
    %291 = vmatpush1.msra.mxu0 0.0
    %292 = vmatprep.subr.mxu0 0.0
    %293 = vmatpush1.msra.mxu0 0.0
    %294 = vmatprep.subr.mxu0 0.0
    %295 = vmatpush1.msra.mxu0 0.0
    %296 = vmatprep.subr.mxu0 0.0
    %297 = vmatpush1.msra.mxu0 0.0
    %298 = vmatprep.mubr.f32.mxu0 0.0
    %299 = vmatmul.mubr.f32.gmra.mrb[0].mxu0 %v98
    %v300 = vpop.f32.mrb[0].mxu0
    %v301 = vadd.f32 0.0, %v300
    %v302 = vpop.f32.mrb[0].mxu0
    %v303 = vadd.f32 0.0, %v302
    %304 = vdwg.mxu0
    %305 = vmatprep.subr.mxu0 %v35
    %306 = vmatpush1.msra.mxu0 %v34
    %307 = vmatprep.subr.mxu0 %v39
    %308 = vmatpush1.msra.mxu0 %v38
    %309 = vmatprep.subr.mxu0 %v43
    %310 = vmatpush1.msra.mxu0 %v42
    %311 = vmatprep.subr.mxu0 %v47
    %312 = vmatpush1.msra.mxu0 %v46
    %313 = vmatprep.subr.mxu0 %v51
    %314 = vmatpush1.msra.mxu0 %v50
    %315 = vmatprep.subr.mxu0 %v55
    %316 = vmatpush1.msra.mxu0 %v54
    %317 = vmatprep.subr.mxu0 %v59
    %318 = vmatpush1.msra.mxu0 %v58
    %319 = vmatprep.subr.mxu0 %v63
    %320 = vmatpush1.msra.mxu0 %v62
    %321 = vmatprep.subr.mxu0 %v67
    %322 = vmatpush1.msra.mxu0 %v66
    %323 = vmatprep.subr.mxu0 %v71
    %324 = vmatpush1.msra.mxu0 %v70
    %325 = vmatprep.subr.mxu0 %v75
    %326 = vmatpush1.msra.mxu0 %v74
    %327 = vmatprep.subr.mxu0 %v79
    %328 = vmatpush1.msra.mxu0 %v78
    %329 = vmatprep.subr.mxu0 %v83
    %330 = vmatpush1.msra.mxu0 %v82
    %331 = vmatprep.subr.mxu0 %v87
    %332 = vmatpush1.msra.mxu0 %v86
    %333 = vmatprep.subr.mxu0 %v91
    %334 = vmatpush1.msra.mxu0 %v90
    %335 = vmatprep.subr.mxu0 %v95
    %336 = vmatpush1.msra.mxu0 %v94
    %337 = vmatprep.subr.mxu0 0.0
    %338 = vmatpush1.msra.mxu0 0.0
    %339 = vmatprep.subr.mxu0 0.0
    %340 = vmatpush1.msra.mxu0 0.0
    %341 = vmatprep.subr.mxu0 0.0
    %342 = vmatpush1.msra.mxu0 0.0
    %343 = vmatprep.subr.mxu0 0.0
    %344 = vmatpush1.msra.mxu0 0.0
    %345 = vmatprep.subr.mxu0 0.0
    %346 = vmatpush1.msra.mxu0 0.0
    %347 = vmatprep.subr.mxu0 0.0
    %348 = vmatpush1.msra.mxu0 0.0
    %349 = vmatprep.subr.mxu0 0.0
    %350 = vmatpush1.msra.mxu0 0.0
    %351 = vmatprep.subr.mxu0 0.0
    %352 = vmatpush1.msra.mxu0 0.0
    %353 = vmatprep.subr.mxu0 0.0
    %354 = vmatpush1.msra.mxu0 0.0
    %355 = vmatprep.subr.mxu0 0.0
    %356 = vmatpush1.msra.mxu0 0.0
    %357 = vmatprep.subr.mxu0 0.0
    %358 = vmatpush1.msra.mxu0 0.0
    %359 = vmatprep.subr.mxu0 0.0
    %360 = vmatpush1.msra.mxu0 0.0
    %361 = vmatprep.subr.mxu0 0.0
    %362 = vmatpush1.msra.mxu0 0.0
    %363 = vmatprep.subr.mxu0 0.0
    %364 = vmatpush1.msra.mxu0 0.0
    %365 = vmatprep.subr.mxu0 0.0
    %366 = vmatpush1.msra.mxu0 0.0
    %367 = vmatprep.subr.mxu0 0.0
    %368 = vmatpush1.msra.mxu0 0.0
    %369 = vmatprep.mubr.f32.mxu0 0.0
    %370 = vmatmul.mubr.f32.gmra.mrb[0].mxu0 %v33
    %v371 = vpop.f32.mrb[0].mxu0
    %v372 = vadd.f32 %v230, %v371
    %v373 = vpop.f32.mrb[0].mxu0
    %v374 = vadd.f32 %v232, %v373
    %375 = vdwg.mxu0
    %376 = vmatprep.subr.mxu0 %v37
    %377 = vmatpush1.msra.mxu0 %v36
    %378 = vmatprep.subr.mxu0 %v41
    %379 = vmatpush1.msra.mxu0 %v40
    %380 = vmatprep.subr.mxu0 %v45
    %381 = vmatpush1.msra.mxu0 %v44
    %382 = vmatprep.subr.mxu0 %v49
    %383 = vmatpush1.msra.mxu0 %v48
    %384 = vmatprep.subr.mxu0 %v53
    %385 = vmatpush1.msra.mxu0 %v52
    %386 = vmatprep.subr.mxu0 %v57
    %387 = vmatpush1.msra.mxu0 %v56
    %388 = vmatprep.subr.mxu0 %v61
    %389 = vmatpush1.msra.mxu0 %v60
    %390 = vmatprep.subr.mxu0 %v65
    %391 = vmatpush1.msra.mxu0 %v64
    %392 = vmatprep.subr.mxu0 %v69
    %393 = vmatpush1.msra.mxu0 %v68
    %394 = vmatprep.subr.mxu0 %v73
    %395 = vmatpush1.msra.mxu0 %v72
    %396 = vmatprep.subr.mxu0 %v77
    %397 = vmatpush1.msra.mxu0 %v76
    %398 = vmatprep.subr.mxu0 %v81
    %399 = vmatpush1.msra.mxu0 %v80
    %400 = vmatprep.subr.mxu0 %v85
    %401 = vmatpush1.msra.mxu0 %v84
    %402 = vmatprep.subr.mxu0 %v89
    %403 = vmatpush1.msra.mxu0 %v88
    %404 = vmatprep.subr.mxu0 %v93
    %405 = vmatpush1.msra.mxu0 %v92
    %406 = vmatprep.subr.mxu0 %v97
    %407 = vmatpush1.msra.mxu0 %v96
    %408 = vmatprep.subr.mxu0 0.0
    %409 = vmatpush1.msra.mxu0 0.0
    %410 = vmatprep.subr.mxu0 0.0
    %411 = vmatpush1.msra.mxu0 0.0
    %412 = vmatprep.subr.mxu0 0.0
    %413 = vmatpush1.msra.mxu0 0.0
    %414 = vmatprep.subr.mxu0 0.0
    %415 = vmatpush1.msra.mxu0 0.0
    %416 = vmatprep.subr.mxu0 0.0
    %417 = vmatpush1.msra.mxu0 0.0
    %418 = vmatprep.subr.mxu0 0.0
    %419 = vmatpush1.msra.mxu0 0.0
    %420 = vmatprep.subr.mxu0 0.0
    %421 = vmatpush1.msra.mxu0 0.0
    %422 = vmatprep.subr.mxu0 0.0
    %423 = vmatpush1.msra.mxu0 0.0
    %424 = vmatprep.subr.mxu0 0.0
    %425 = vmatpush1.msra.mxu0 0.0
    %426 = vmatprep.subr.mxu0 0.0
    %427 = vmatpush1.msra.mxu0 0.0
    %428 = vmatprep.subr.mxu0 0.0
    %429 = vmatpush1.msra.mxu0 0.0
    %430 = vmatprep.subr.mxu0 0.0
    %431 = vmatpush1.msra.mxu0 0.0
    %432 = vmatprep.subr.mxu0 0.0
    %433 = vmatpush1.msra.mxu0 0.0
    %434 = vmatprep.subr.mxu0 0.0
    %435 = vmatpush1.msra.mxu0 0.0
    %436 = vmatprep.subr.mxu0 0.0
    %437 = vmatpush1.msra.mxu0 0.0
    %438 = vmatprep.subr.mxu0 0.0
    %439 = vmatpush1.msra.mxu0 0.0
    %440 = vmatprep.mubr.f32.mxu0 0.0
    %441 = vmatmul.mubr.f32.gmra.mrb[0].mxu0 %v33
    %v442 = vpop.f32.mrb[0].mxu0
    %v443 = vadd.f32 %v301, %v442
    %v444 = vpop.f32.mrb[0].mxu0
    %v445 = vadd.f32 %v303, %v444
    %446 = vdwg.mxu0
    %v447 = vxor.u32 %v372, 2147483648
    %v448 = vmul.f32 %v447, 1.442695
    %v449 = vpow.pop %v448
    %v450 = vadd.f32 %v449, 1.0
    %v451 = vrcp.pop %v450
    %v452 = vmul.f32 1.0, %v451
    %v453 = vxor.u32 %v374, 2147483648
    %v454 = vmul.f32 %v453, 1.442695
    %v455 = vpow.pop %v454
    %v456 = vadd.f32 %v455, 1.0
    %v457 = vrcp.pop %v456
    %v458 = vmul.f32 1.0, %v457
    %v459 = vtanh.pop %v443
    %v460 = vxor.u32 %v445, 2147483648
    %v461 = vmul.f32 %v460, 1.442695
    %v462 = vpow.pop %v461
    %v463 = vadd.f32 %v462, 1.0
    %v464 = vrcp.pop %v463
    %v465 = vmul.f32 1.0, %v464
    %v466 = vld [vmem:[%s2] sm:$0xff]
    %v467 = vmul.f32 %v458, %v466
    %v468 = vmul.f32 %v452, %v459
    %v469 = vadd.f32 %v467, %v468
    %v470 = vtanh.pop %v469
    %v471 = vmul.f32 %v465, %v470
    %472 = vst [vmem:[%s4] sm:$0xff] %v471
    %473 = vst [vmem:[%s5] sm:$0xff] %v469
    // Predicated region
    $region22: #{mega_lstm_forward.1} parent=1 // pred_check
      _
    $region23: #{mega_lstm_forward.1} parent=1 // pred_check_branch
      %475 = sbr.rel (0) target = $region25
    $region24: #{mega_lstm_forward.1} parent=1 // pred_region
      _
    $region25: #{mega_lstm_forward.1} parent=1 // pred_fallthru
      _
    // Predicated region
    $region26: #{mega_lstm_forward.1} parent=1 // pred_check
      _
    $region27: #{mega_lstm_forward.1} parent=1 // pred_check_branch
      %477 = sbr.rel (0) target = $region29
    $region28: #{mega_lstm_forward.1} parent=1 // pred_region
      _
    $region29: #{mega_lstm_forward.1} parent=1 // pred_fallthru
      _
    // Predicated region
    $region30: #{mega_lstm_forward.1} parent=1 // pred_check
      _
    $region31: #{mega_lstm_forward.1} parent=1 // pred_check_branch
      %479 = sbr.rel (0) target = $region33
    $region32: #{mega_lstm_forward.1} parent=1 // pred_region
      _
    $region33: #{mega_lstm_forward.1} parent=1 // pred_fallthru
      _
    // Predicated region
    $region34: #{mega_lstm_forward.1} parent=1 // pred_check
      _
    $region35: #{mega_lstm_forward.1} parent=1 // pred_check_branch
      %481 = sbr.rel (0) target = $region37
    $region36: #{mega_lstm_forward.1} parent=1 // pred_region
      _
    $region37: #{mega_lstm_forward.1} parent=1 // pred_fallthru
      _
    %482 = vsyncpa [#allocation3], 1

</llo_original>
